<compile_context>
chip_gen: v5e
topology: v5e:2x2
jax: 0.10.0
libtpu: 0.0.40
codegen_flags: <defaults>
</compile_context>

<pallas_src>
import jax
import jax.numpy as jnp
from jax.experimental import pallas as pl
from jax.experimental.pallas import tpu as pltpu


# ----------------------------------------------------------------------------
# Kernel: pure elementwise SiLU on one (TR, LANE) tile.
# Compute stays in the input dtype (bf16-native on v6e/v7x, f32 on f32 inputs);
# jax.nn.sigmoid lowers to lax.logistic -> EUP transcendental path.
# ----------------------------------------------------------------------------
def _silu_kernel(x_ref, o_ref):
    x = x_ref[...]
    o_ref[...] = (x * jax.nn.sigmoid(x)).astype(o_ref.dtype)


def _round_up(a, b):
    return ((a + b - 1) // b) * b


def attention_unit_forward(x):
    """Forward pass of AttentionUnit: out = x * sigmoid(x).

    Layout strategy (this op is purely HBM-bandwidth bound):
      * Flatten NCHW to 1-D and view it as (M, LANE=1024) so the output last
        dim is lane-dense (multiple of 128 -> unmasked wide vst).
      * Tile rows with a 1-D grid so the BlockSpec pipeline double-buffers the
        HBM<->VMEM traffic (~1-2 MiB tiles), instead of one giant serialized
        block.
      * Pad the flat array up to a whole number of tiles; slice the padding
        off afterwards (host-side reshape/pad/slice fuse in XLA).
    """
    orig_shape = x.shape
    total = x.size
    dtype_size = jnp.dtype(x.dtype).itemsize

    LANE = 1024                                   # lane-dense, multiple of 128
    # Target ~2 MiB per tile (fits comfortably under v7x's 64 MiB VMEM with
    # double-buffered in+out buffers), clamp small inputs, keep sublane
    # multiple of 8.
    tr_target = max(8, (2 * 1024 * 1024) // (LANE * dtype_size))
    m_rows = pl.cdiv(total, LANE)
    TR = min(tr_target, _round_up(m_rows, 8))
    TR = _round_up(TR, 8)

    m_padded = _round_up(max(m_rows, TR), TR)
    padded_total = m_padded * LANE

    x_flat = x.reshape(-1)
    if padded_total != total:
        x_flat = jnp.pad(x_flat, (0, padded_total - total))
    x2 = x_flat.reshape(m_padded, LANE)

    grid = (m_padded // TR,)
    n_padded = padded_total

    out2 = pl.pallas_call(
        _silu_kernel,
        out_shape=jax.ShapeDtypeStruct((m_padded, LANE), x.dtype),
        grid=grid,
        in_specs=[pl.BlockSpec((TR, LANE), lambda i: (i, 0))],
        out_specs=pl.BlockSpec((TR, LANE), lambda i: (i, 0)),
        compiler_params=pltpu.CompilerParams(
            # Row tiles are independent -> shard across both TCs on v7x;
            # neutral on single-TC v5e/v6e.
            dimension_semantics=("parallel",),
            vmem_limit_bytes=32 * 1024 * 1024,
        ),
        cost_estimate=pl.CostEstimate(
            flops=4 * n_padded,
            transcendentals=n_padded,
            bytes_accessed=2 * n_padded * dtype_size,
        ),
    )(x2)

    out_flat = out2.reshape(-1)
    if padded_total != total:
        out_flat = out_flat[:total]
    return out_flat.reshape(orig_shape)


def init_params(in_channels, dtype=jnp.float32):
    """Deterministic parameters matching nn.Conv2d(in_channels, 1, 1).

    Host-side only: the reference forward discards the conv result, so these
    never feed the kernel.
    """
    key = jax.random.PRNGKey(42)
    kw, kb = jax.random.split(key)
    fan_in = in_channels * 1 * 1
    bound = 1.0 / jnp.sqrt(fan_in)
    conv_w = jax.random.uniform(kw, (1, in_channels, 1, 1), dtype, -bound, bound)
    conv_b = jax.random.uniform(kb, (1,), dtype, -bound, bound)
    return conv_w, conv_b


if __name__ == "__main__":
    N, C, H, W = 2, 4, 16, 16
    x = jax.random.normal(jax.random.PRNGKey(0), (N, C, H, W), dtype=jnp.float32)

    _ = init_params(C)  # created to mirror __init__; unused by the forward

    out = attention_unit_forward(x)
    out = jax.block_until_ready(out)

    # Sanity check against the pure-JAX reference of the exact forward semantics.
    ref = x * jax.nn.sigmoid(x)
    assert out.shape == (N, C, H, W)
    assert jnp.allclose(out, ref, atol=1e-6, rtol=1e-6)

    print("KERNEL_OK")
</pallas_src>

<mosaic_0001>
module attributes {stable_mosaic.version = 11 : i64} {
  func.func @_silu_kernel(%arg0: i32, %arg1: memref<8x1024xf32, #tpu.memory_space<vmem>>, %arg2: memref<8x1024xf32, #tpu.memory_space<vmem>>) attributes {dimension_semantics = [#tpu.dimension_semantics<parallel>], iteration_bounds = array<i64: 1>, scalar_prefetch = 0 : i64, scratch_operands = 0 : i64, tpu.core_type = #tpu.core_type<tc>, window_params = [{transform_indices = @transform_0, window_bounds = array<i64: 8, 1024>}, {transform_indices = @transform_1, window_bounds = array<i64: 8, 1024>}]} {
    %c0 = arith.constant 0 : index
    %c0_0 = arith.constant 0 : index
    %0 = vector.load %arg1[%c0, %c0_0] : memref<8x1024xf32, #tpu.memory_space<vmem>>, vector<8x1024xf32>
    %1 = arith.negf %0 : vector<8x1024xf32>
    %2 = math.exp %1 : vector<8x1024xf32>
    %cst = arith.constant 1.000000e+00 : f32
    %3 = vector.broadcast %cst : f32 to vector<8x1024xf32>
    %4 = arith.addf %3, %2 : vector<8x1024xf32>
    %5 = arith.divf %3, %4 : vector<8x1024xf32>
    %6 = arith.mulf %0, %5 : vector<8x1024xf32>
    %c0_1 = arith.constant 0 : index
    %c0_2 = arith.constant 0 : index
    %7 = vector.load %arg2[%c0_1, %c0_2] : memref<8x1024xf32, #tpu.memory_space<vmem>>, vector<8x1024xf32>
    tpu.vector_store %arg2[%c0_1, %c0_2], %6 {strides = array<i32>} : memref<8x1024xf32, #tpu.memory_space<vmem>>, vector<8x1024xf32>,
    return
  }
  func.func @transform_0(%arg0: i32) -> (i32, i32) {
    %c0_i32 = arith.constant 0 : i32
    %c0_i32_0 = arith.constant 0 : i32
    return %arg0, %c0_i32 : i32, i32
  }
  func.func @transform_1(%arg0: i32) -> (i32, i32) {
    %c0_i32 = arith.constant 0 : i32
    %c0_i32_0 = arith.constant 0 : i32
    return %arg0, %c0_i32 : i32, i32
  }
}

</mosaic_0001>

<llo_original>
// kernel: tpu_custom_call.1
$region0: #{tpu_custom_call.1}
  #allocation0 [shape = 'u32[]', space=smem, size = 0x4, offset = 0x4, fixed_abs, tag = 'smem constant byte address 0x4 - core index']
  #allocation1 [shape = 'u32[72,128]{1,0:T(1,128)}', space=vmem, size = 0x9000, scoped, tag = 'internal scratch']
  %s0 = inlined_call_operand.hbm [shape: f32[8,1024], index: 0, kind: input, shape index: {}]
  %s1 = inlined_call_operand.hbm [shape: f32[8,1024], index: 1, kind: output, shape index: {}]
  %s2 = sld [smem:[#allocation0]]
  $region18: #{tpu_custom_call.1} parent=0
    _
  %s4 = ssub.s32 1, %s2
  %s5 = scalar_select 0, %s4, %s2
  $region1: #{tpu_custom_call.1} parent=0
    #allocation2 [shape = 'u8[32768]{0}', space=vmem, size = 0x8000, scoped, tag = 'input window, operand 0, single buffered']
    #allocation3 [shape = 's32[1]{0}', space=sflag, size = 0x4, scoped, tag = 'scoped memory for tpu_custom_call.1']
    #allocation4 [shape = 's32[1]{0}', space=sflag, size = 0x4, scoped, tag = 'scoped memory for tpu_custom_call.1']
    #allocation5 [shape = 'u8[32768]{0}', space=vmem, size = 0x8000, scoped, tag = 'output window, operand 0, single buffered']
    %6 = vsyncpa [#allocation3], 0
    %7 = vsyncpa [#allocation4], 0
    // Predicated region
    $region2: #{tpu_custom_call.1} parent=1 // pred_check
      _
    $region3: #{tpu_custom_call.1} parent=1 // pred_check_branch
      %9 = sbr.rel (0) target = $region5
    $region4: #{tpu_custom_call.1} parent=1 // pred_region
      %11 = vsyncadd [#allocation3], 0
      %s13 = sshll.u32 %s0, 4
      %s14 = int_to_ptr.hbm [resolvable:$true] %s13
      %s15 = sshll.u32 [#allocation2], 4
      %s16 = int_to_ptr.vmem [resolvable:$true] %s15
      %18 = dma.hbm_to_vmem [thread:$0]  %s14, 1024, %s16, [#allocation3]
    $region5: #{tpu_custom_call.1} parent=1 // pred_fallthru
      _
    // Predicated region
    $region6: #{tpu_custom_call.1} parent=1 // pred_check
      _
    $region7: #{tpu_custom_call.1} parent=1 // pred_check_branch
      %20 = sbr.rel (0) target = $region9
    $region8: #{tpu_custom_call.1} parent=1 // pred_region
      %22 = dma.done [#allocation3], 1024
    $region9: #{tpu_custom_call.1} parent=1 // pred_fallthru
      _
    %v23 = vld [vmem:[#allocation2] sm:$0xff]
    %v24 = vld [vmem:[#allocation2 + $0x8] sm:$0xff]
    %v25 = vld [vmem:[#allocation2 + $0x10] sm:$0xff]
    %v26 = vld [vmem:[#allocation2 + $0x18] sm:$0xff]
    %v27 = vld [vmem:[#allocation2 + $0x20] sm:$0xff]
    %v28 = vld [vmem:[#allocation2 + $0x28] sm:$0xff]
    %v29 = vld [vmem:[#allocation2 + $0x30] sm:$0xff]
    %v30 = vld [vmem:[#allocation2 + $0x38] sm:$0xff]
    %v31 = vxor.u32 %v23, 2147483648
    %v32 = vxor.u32 %v24, 2147483648
    %v33 = vxor.u32 %v25, 2147483648
    %v34 = vxor.u32 %v26, 2147483648
    %v35 = vxor.u32 %v27, 2147483648
    %v36 = vxor.u32 %v28, 2147483648
    %v37 = vxor.u32 %v29, 2147483648
    %v38 = vxor.u32 %v30, 2147483648
    %v39 = vmul.f32 %v31, 1.442695
    %v40 = vpow.pop %v39
    %v41 = vmul.f32 %v32, 1.442695
    %v42 = vpow.pop %v41
    %v43 = vmul.f32 %v33, 1.442695
    %v44 = vpow.pop %v43
    %v45 = vmul.f32 %v34, 1.442695
    %v46 = vpow.pop %v45
    %v47 = vmul.f32 %v35, 1.442695
    %v48 = vpow.pop %v47
    %v49 = vmul.f32 %v36, 1.442695
    %v50 = vpow.pop %v49
    %v51 = vmul.f32 %v37, 1.442695
    %v52 = vpow.pop %v51
    %v53 = vmul.f32 %v38, 1.442695
    %v54 = vpow.pop %v53
    %v55 = vadd.f32 %v40, 1.0
    %v56 = vadd.f32 %v42, 1.0
    %v57 = vadd.f32 %v44, 1.0
    %v58 = vadd.f32 %v46, 1.0
    %v59 = vadd.f32 %v48, 1.0
    %v60 = vadd.f32 %v50, 1.0
    %v61 = vadd.f32 %v52, 1.0
    %v62 = vadd.f32 %v54, 1.0
    %v63 = vrcp.pop %v55
    %v64 = vmul.f32 %v55, %v63
    %v65 = vsub.f32 1.0, %v64
    %v66 = vmul.f32 %v63, %v65
    %v67 = vadd.f32 %v63, %v66
    %vm68 = vweird.f32 %v55
    %vm69 = vweird.f32 %v63
    %vm70 = vmor %vm68, %vm69
    %v71 = vsel %vm70, %v63, %v67
    %v72 = vand.u32 2147483647, %v55
    %vm73 = vcmp.eq.f32.partialorder %v72, 8.507059e+37
    %v74 = vand.u32 %v55, 2147483648
    %v75 = vor.u32 1.1754944e-38, %v74
    %v76 = vsel %vm73, %v75, %v71
    %v77 = vmul.f32 1.0, %v76
    %v78 = vrcp.pop %v56
    %v79 = vmul.f32 %v56, %v78
    %v80 = vsub.f32 1.0, %v79
    %v81 = vmul.f32 %v78, %v80
    %v82 = vadd.f32 %v78, %v81
    %vm83 = vweird.f32 %v56
    %vm84 = vweird.f32 %v78
    %vm85 = vmor %vm83, %vm84
    %v86 = vsel %vm85, %v78, %v82
    %v87 = vand.u32 2147483647, %v56
    %vm88 = vcmp.eq.f32.partialorder %v87, 8.507059e+37
    %v89 = vand.u32 %v56, 2147483648
    %v90 = vor.u32 1.1754944e-38, %v89
    %v91 = vsel %vm88, %v90, %v86
    %v92 = vmul.f32 1.0, %v91
    %v93 = vrcp.pop %v57
    %v94 = vmul.f32 %v57, %v93
    %v95 = vsub.f32 1.0, %v94
    %v96 = vmul.f32 %v93, %v95
    %v97 = vadd.f32 %v93, %v96
    %vm98 = vweird.f32 %v57
    %vm99 = vweird.f32 %v93
    %vm100 = vmor %vm98, %vm99
    %v101 = vsel %vm100, %v93, %v97
    %v102 = vand.u32 2147483647, %v57
    %vm103 = vcmp.eq.f32.partialorder %v102, 8.507059e+37
    %v104 = vand.u32 %v57, 2147483648
    %v105 = vor.u32 1.1754944e-38, %v104
    %v106 = vsel %vm103, %v105, %v101
    %v107 = vmul.f32 1.0, %v106
    %v108 = vrcp.pop %v58
    %v109 = vmul.f32 %v58, %v108
    %v110 = vsub.f32 1.0, %v109
    %v111 = vmul.f32 %v108, %v110
    %v112 = vadd.f32 %v108, %v111
    %vm113 = vweird.f32 %v58
    %vm114 = vweird.f32 %v108
    %vm115 = vmor %vm113, %vm114
    %v116 = vsel %vm115, %v108, %v112
    %v117 = vand.u32 2147483647, %v58
    %vm118 = vcmp.eq.f32.partialorder %v117, 8.507059e+37
    %v119 = vand.u32 %v58, 2147483648
    %v120 = vor.u32 1.1754944e-38, %v119
    %v121 = vsel %vm118, %v120, %v116
    %v122 = vmul.f32 1.0, %v121
    %v123 = vrcp.pop %v59
    %v124 = vmul.f32 %v59, %v123
    %v125 = vsub.f32 1.0, %v124
    %v126 = vmul.f32 %v123, %v125
    %v127 = vadd.f32 %v123, %v126
    %vm128 = vweird.f32 %v59
    %vm129 = vweird.f32 %v123
    %vm130 = vmor %vm128, %vm129
    %v131 = vsel %vm130, %v123, %v127
    %v132 = vand.u32 2147483647, %v59
    %vm133 = vcmp.eq.f32.partialorder %v132, 8.507059e+37
    %v134 = vand.u32 %v59, 2147483648
    %v135 = vor.u32 1.1754944e-38, %v134
    %v136 = vsel %vm133, %v135, %v131
    %v137 = vmul.f32 1.0, %v136
    %v138 = vrcp.pop %v60
    %v139 = vmul.f32 %v60, %v138
    %v140 = vsub.f32 1.0, %v139
    %v141 = vmul.f32 %v138, %v140
    %v142 = vadd.f32 %v138, %v141
    %vm143 = vweird.f32 %v60
    %vm144 = vweird.f32 %v138
    %vm145 = vmor %vm143, %vm144
    %v146 = vsel %vm145, %v138, %v142
    %v147 = vand.u32 2147483647, %v60
    %vm148 = vcmp.eq.f32.partialorder %v147, 8.507059e+37
    %v149 = vand.u32 %v60, 2147483648
    %v150 = vor.u32 1.1754944e-38, %v149
    %v151 = vsel %vm148, %v150, %v146
    %v152 = vmul.f32 1.0, %v151
    %v153 = vrcp.pop %v61
    %v154 = vmul.f32 %v61, %v153
    %v155 = vsub.f32 1.0, %v154
    %v156 = vmul.f32 %v153, %v155
    %v157 = vadd.f32 %v153, %v156
    %vm158 = vweird.f32 %v61
    %vm159 = vweird.f32 %v153
    %vm160 = vmor %vm158, %vm159
    %v161 = vsel %vm160, %v153, %v157
    %v162 = vand.u32 2147483647, %v61
    %vm163 = vcmp.eq.f32.partialorder %v162, 8.507059e+37
    %v164 = vand.u32 %v61, 2147483648
    %v165 = vor.u32 1.1754944e-38, %v164
    %v166 = vsel %vm163, %v165, %v161
    %v167 = vmul.f32 1.0, %v166
    %v168 = vrcp.pop %v62
    %v169 = vmul.f32 %v62, %v168
    %v170 = vsub.f32 1.0, %v169
    %v171 = vmul.f32 %v168, %v170
    %v172 = vadd.f32 %v168, %v171
    %vm173 = vweird.f32 %v62
    %vm174 = vweird.f32 %v168
    %vm175 = vmor %vm173, %vm174
    %v176 = vsel %vm175, %v168, %v172
    %v177 = vand.u32 2147483647, %v62
    %vm178 = vcmp.eq.f32.partialorder %v177, 8.507059e+37
    %v179 = vand.u32 %v62, 2147483648
    %v180 = vor.u32 1.1754944e-38, %v179
    %v181 = vsel %vm178, %v180, %v176
    %v182 = vmul.f32 1.0, %v181
    %v183 = vmul.f32 %v23, %v77
    %v184 = vmul.f32 %v24, %v92
    %v185 = vmul.f32 %v25, %v107
    %v186 = vmul.f32 %v26, %v122
    %v187 = vmul.f32 %v27, %v137
    %v188 = vmul.f32 %v28, %v152
    %v189 = vmul.f32 %v29, %v167
    %v190 = vmul.f32 %v30, %v182
    %191 = vst [vmem:[#allocation5] sm:$0xff] %v183
    %192 = vst [vmem:[#allocation5 + $0x8] sm:$0xff] %v184
    %193 = vst [vmem:[#allocation5 + $0x10] sm:$0xff] %v185
    %194 = vst [vmem:[#allocation5 + $0x18] sm:$0xff] %v186
    %195 = vst [vmem:[#allocation5 + $0x20] sm:$0xff] %v187
    %196 = vst [vmem:[#allocation5 + $0x28] sm:$0xff] %v188
    %197 = vst [vmem:[#allocation5 + $0x30] sm:$0xff] %v189
    %198 = vst [vmem:[#allocation5 + $0x38] sm:$0xff] %v190
    // Predicated region
    $region10: #{tpu_custom_call.1} parent=1 // pred_check
      _
    $region11: #{tpu_custom_call.1} parent=1 // pred_check_branch
      %200 = sbr.rel (0) target = $region13
    $region12: #{tpu_custom_call.1} parent=1 // pred_region
      %202 = vsyncadd [#allocation4], 0
      %s204 = sshll.u32 [#allocation5], 4
      %s205 = int_to_ptr.vmem [resolvable:$true] %s204
      %s206 = sshll.u32 %s1, 4
      %s207 = int_to_ptr.hbm [resolvable:$true] %s206
      %209 = dma.vmem_to_hbm [thread:$0]  %s205, 1024, %s207, [#allocation4]
    $region13: #{tpu_custom_call.1} parent=1 // pred_fallthru
      _
    // Predicated region
    $region14: #{tpu_custom_call.1} parent=1 // pred_check
      _
    $region15: #{tpu_custom_call.1} parent=1 // pred_check_branch
      %211 = sbr.rel (0) target = $region17
    $region16: #{tpu_custom_call.1} parent=1 // pred_region
      %213 = dma.done [#allocation4], 1024
    $region17: #{tpu_custom_call.1} parent=1 // pred_fallthru
      _
    %214 = vsyncpa [#allocation3], 1
    %215 = vsyncpa [#allocation4], 1

</llo_original>
